<compile_context>
chip_gen: v5e
topology: v5e:2x2
jax: 0.10.0
libtpu: 0.0.40
codegen_flags: <defaults>
</compile_context>

<pallas_src>
import functools

import jax
import jax.numpy as jnp
from jax.experimental import pallas as pl
from jax.experimental.pallas import tpu as pltpu


def _qdq_kernel(x_ref, s_ref, inv_s_ref, zp_ref, o_ref, *, quant_min, quant_max):
    x = x_ref[...]          # (tm, tr) float32
    s = s_ref[...]          # (tm, 1)  float32, per-row scale
    inv_s = inv_s_ref[...]  # (tm, 1)  float32, per-row 1/scale (hoisted divide)
    zp = zp_ref[...]        # (tm, 1)  float32, per-row zero point

    # quantize_per_channel (decomposed): round(x * inv_scale) + zp, clamp.
    q = jnp.clip(jnp.round(x * inv_s) + zp, quant_min, quant_max)
    # Cast to the integer quant dtype and back is a numerical no-op here
    # (values are integral and within the int8/uint8 range), so it is elided.
    # dequantize_per_channel (decomposed):
    o_ref[...] = (q - zp) * s


def quantize_dequantize_per_channel(x, scales, zero_points, *, axis,
                                    quant_min, quant_max):
    """x: any-rank float32 array. scales/zero_points: 1-D, length x.shape[axis]."""
    orig_shape = x.shape
    ndim = x.ndim
    axis = axis % ndim
    C = orig_shape[axis]

    B = 1
    for d in orig_shape[:axis]:
        B *= d
    R = 1
    for d in orig_shape[axis + 1:]:
        R *= d
    M = B * C

    # Zero-copy 2-D view: rows = (leading dims, channel), lanes = trailing dims.
    x2d = x.reshape(M, R)

    s = scales.astype(jnp.float32)
    zp = zero_points.astype(jnp.float32)
    # row r = b*C + c  ->  channel c = r % C ; tiny host-side arrays (M elements).
    s_rows = jnp.tile(s, B).reshape(M, 1)
    inv_s_rows = 1.0 / s_rows          # hoist the divide out of the kernel
    zp_rows = jnp.tile(zp, B).reshape(M, 1)

    # Tile selection: lane tile = full R or a large multiple of 128; sublane tile
    # = full M or a multiple of 8.  Max block = 128 * 4096 * 4 B = 2 MiB, so
    # in+out double-buffered stays well under default scoped VMEM on all chips.
    tile_r = R if R <= 4096 else 4096
    tile_m = M if M <= 128 else 128

    grid = (pl.cdiv(M, tile_m), pl.cdiv(R, tile_r))

    kernel = functools.partial(
        _qdq_kernel, quant_min=float(quant_min), quant_max=float(quant_max)
    )

    out2d = pl.pallas_call(
        kernel,
        out_shape=jax.ShapeDtypeStruct((M, R), jnp.float32),
        grid=grid,
        in_specs=[
            pl.BlockSpec((tile_m, tile_r), lambda i, j: (i, j)),  # x tile
            pl.BlockSpec((tile_m, 1), lambda i, j: (i, 0)),       # scale (row-resident)
            pl.BlockSpec((tile_m, 1), lambda i, j: (i, 0)),       # 1/scale
            pl.BlockSpec((tile_m, 1), lambda i, j: (i, 0)),       # zero point
        ],
        out_specs=pl.BlockSpec((tile_m, tile_r), lambda i, j: (i, j)),
        compiler_params=pltpu.CompilerParams(
            dimension_semantics=("parallel", "parallel"),
            vmem_limit_bytes=32 * 1024 * 1024,
        ),
    )(x2d, s_rows, inv_s_rows, zp_rows)

    # Zero-copy reshape back to the original shape (no transpose needed).
    return out2d.reshape(orig_shape)


def _reference(x, scales, zero_points, axis, quant_min, quant_max):
    # Pure-JAX reference of torch's decomposed quantize->dequantize round trip.
    shape = [1] * x.ndim
    shape[axis] = x.shape[axis]
    s = scales.reshape(shape).astype(jnp.float32)
    zp = zero_points.reshape(shape).astype(jnp.float32)
    q = jnp.clip(jnp.round(x * (1.0 / s)) + zp, quant_min, quant_max)
    q = q.astype(jnp.int8).astype(jnp.float32)   # dtype=torch.int8 round trip
    return (q - zp) * s


if __name__ == "__main__":
    key = jax.random.PRNGKey(0)

    # NCHW input, per-channel quantization along axis=1, int8 quant range.
    N, C, H, W = 2, 4, 16, 16
    axis = 1
    quant_min, quant_max = -128, 127          # dtype = torch.int8

    x = jax.random.normal(key, (N, C, H, W), dtype=jnp.float32) * 3.0
    scales = jnp.array([0.05, 0.1, 0.2, 0.4], dtype=jnp.float32)
    zero_points = jnp.array([0.0, 1.0, -2.0, 3.0], dtype=jnp.float32)

    out = quantize_dequantize_per_channel(
        x, scales, zero_points, axis=axis, quant_min=quant_min, quant_max=quant_max
    )
    out = jax.block_until_ready(out)

    ref = _reference(x, scales, zero_points, axis, quant_min, quant_max)
    assert out.shape == x.shape and out.dtype == jnp.float32
    assert jnp.allclose(out, ref, atol=1e-6, rtol=1e-6), "mismatch vs reference"

    print("KERNEL_OK")
</pallas_src>

<mosaic_0001>
module attributes {stable_mosaic.version = 11 : i64} {
  func.func @_qdq_kernel(%arg0: i32, %arg1: i32, %arg2: memref<8x256xf32, #tpu.memory_space<vmem>>, %arg3: memref<8x1xf32, #tpu.memory_space<vmem>>, %arg4: memref<8x1xf32, #tpu.memory_space<vmem>>, %arg5: memref<8x1xf32, #tpu.memory_space<vmem>>, %arg6: memref<8x256xf32, #tpu.memory_space<vmem>>) attributes {dimension_semantics = [#tpu.dimension_semantics<parallel>, #tpu.dimension_semantics<parallel>], iteration_bounds = array<i64: 1, 1>, scalar_prefetch = 0 : i64, scratch_operands = 0 : i64, tpu.core_type = #tpu.core_type<tc>, window_params = [{transform_indices = @transform_0, window_bounds = array<i64: 8, 256>}, {transform_indices = @transform_1, window_bounds = array<i64: 8, 1>}, {transform_indices = @transform_2, window_bounds = array<i64: 8, 1>}, {transform_indices = @transform_3, window_bounds = array<i64: 8, 1>}, {transform_indices = @transform_4, window_bounds = array<i64: 8, 256>}]} {
    %c0 = arith.constant 0 : index
    %c0_0 = arith.constant 0 : index
    %0 = vector.load %arg2[%c0, %c0_0] : memref<8x256xf32, #tpu.memory_space<vmem>>, vector<8x256xf32>
    %c0_1 = arith.constant 0 : index
    %c0_2 = arith.constant 0 : index
    %1 = vector.load %arg3[%c0_1, %c0_2] : memref<8x1xf32, #tpu.memory_space<vmem>>, vector<8x1xf32>
    %c0_3 = arith.constant 0 : index
    %c0_4 = arith.constant 0 : index
    %2 = vector.load %arg4[%c0_3, %c0_4] : memref<8x1xf32, #tpu.memory_space<vmem>>, vector<8x1xf32>
    %c0_5 = arith.constant 0 : index
    %c0_6 = arith.constant 0 : index
    %3 = vector.load %arg5[%c0_5, %c0_6] : memref<8x1xf32, #tpu.memory_space<vmem>>, vector<8x1xf32>
    %4 = vector.broadcast %2 : vector<8x1xf32> to vector<8x256xf32>
    %5 = arith.mulf %0, %4 : vector<8x256xf32>
    %6 = math.roundeven %5 : vector<8x256xf32>
    %7 = vector.broadcast %3 : vector<8x1xf32> to vector<8x256xf32>
    %8 = arith.addf %6, %7 : vector<8x256xf32>
    %cst = arith.constant -1.280000e+02 : f32
    %cst_7 = arith.constant 1.270000e+02 : f32
    %9 = vector.broadcast %cst : f32 to vector<8x256xf32>
    %10 = arith.maximumf %9, %8 : vector<8x256xf32>
    %11 = vector.broadcast %cst_7 : f32 to vector<8x256xf32>
    %12 = arith.minimumf %11, %10 : vector<8x256xf32>
    %13 = vector.broadcast %3 : vector<8x1xf32> to vector<8x256xf32>
    %14 = arith.subf %12, %13 : vector<8x256xf32>
    %15 = vector.broadcast %1 : vector<8x1xf32> to vector<8x256xf32>
    %16 = arith.mulf %14, %15 : vector<8x256xf32>
    %c0_8 = arith.constant 0 : index
    %c0_9 = arith.constant 0 : index
    %17 = vector.load %arg6[%c0_8, %c0_9] : memref<8x256xf32, #tpu.memory_space<vmem>>, vector<8x256xf32>
    tpu.vector_store %arg6[%c0_8, %c0_9], %16 {strides = array<i32>} : memref<8x256xf32, #tpu.memory_space<vmem>>, vector<8x256xf32>,
    return
  }
  func.func @transform_0(%arg0: i32, %arg1: i32) -> (i32, i32) {
    %c0_i32 = arith.constant 0 : i32
    return %arg0, %arg1 : i32, i32
  }
  func.func @transform_1(%arg0: i32, %arg1: i32) -> (i32, i32) {
    %c0_i32 = arith.constant 0 : i32
    %c0_i32_0 = arith.constant 0 : i32
    return %arg0, %c0_i32 : i32, i32
  }
  func.func @transform_2(%arg0: i32, %arg1: i32) -> (i32, i32) {
    %c0_i32 = arith.constant 0 : i32
    %c0_i32_0 = arith.constant 0 : i32
    return %arg0, %c0_i32 : i32, i32
  }
  func.func @transform_3(%arg0: i32, %arg1: i32) -> (i32, i32) {
    %c0_i32 = arith.constant 0 : i32
    %c0_i32_0 = arith.constant 0 : i32
    return %arg0, %c0_i32 : i32, i32
  }
  func.func @transform_4(%arg0: i32, %arg1: i32) -> (i32, i32) {
    %c0_i32 = arith.constant 0 : i32
    return %arg0, %arg1 : i32, i32
  }
}

</mosaic_0001>

<llo_original>
// kernel: tpu_custom_call.1
$region0: #{tpu_custom_call.1}
  #allocation0 [shape = 'u32[]', space=smem, size = 0x4, offset = 0x4, fixed_abs, tag = 'smem constant byte address 0x4 - core index']
  #allocation1 [shape = 'u32[72,128]{1,0:T(1,128)}', space=vmem, size = 0x9000, scoped, tag = 'internal scratch']
  %s0 = inlined_call_operand.vmem [shape: f32[8,256], index: 0, kind: input, shape index: {}]
  %s1 = inlined_call_operand.vmem [shape: f32[8,1], index: 1, kind: input, shape index: {}]
  %s2 = inlined_call_operand.vmem [shape: f32[8,1], index: 2, kind: input, shape index: {}]
  %s3 = inlined_call_operand.vmem [shape: f32[8,1], index: 3, kind: input, shape index: {}]
  %s4 = inlined_call_operand.hbm [shape: f32[8,256], index: 4, kind: output, shape index: {}]
  %s5 = sld [smem:[#allocation0]]
  $region26: #{tpu_custom_call.1} parent=0
    _
  %s7 = ssub.s32 1, %s5
  %s8 = scalar_select 0, %s7, %s5
  $region1: #{tpu_custom_call.1} parent=0
    #allocation2 [shape = 'u8[8192]{0}', space=vmem, size = 0x2000, scoped, tag = 'output window, operand 0, single buffered']
    #allocation3 [shape = 's32[1]{0}', space=sflag, size = 0x4, scoped, tag = 'scoped memory for tpu_custom_call.1']
    %9 = vsyncpa [#allocation3], 0
    // Predicated region
    $region2: #{tpu_custom_call.1} parent=1 // pred_check
      _
    $region3: #{tpu_custom_call.1} parent=1 // pred_check_branch
      %11 = sbr.rel (0) target = $region5
    $region4: #{tpu_custom_call.1} parent=1 // pred_region
      _
    $region5: #{tpu_custom_call.1} parent=1 // pred_fallthru
      _
    // Predicated region
    $region6: #{tpu_custom_call.1} parent=1 // pred_check
      _
    $region7: #{tpu_custom_call.1} parent=1 // pred_check_branch
      %13 = sbr.rel (0) target = $region9
    $region8: #{tpu_custom_call.1} parent=1 // pred_region
      _
    $region9: #{tpu_custom_call.1} parent=1 // pred_fallthru
      _
    // Predicated region
    $region10: #{tpu_custom_call.1} parent=1 // pred_check
      _
    $region11: #{tpu_custom_call.1} parent=1 // pred_check_branch
      %15 = sbr.rel (0) target = $region13
    $region12: #{tpu_custom_call.1} parent=1 // pred_region
      _
    $region13: #{tpu_custom_call.1} parent=1 // pred_fallthru
      _
    // Predicated region
    $region14: #{tpu_custom_call.1} parent=1 // pred_check
      _
    $region15: #{tpu_custom_call.1} parent=1 // pred_check_branch
      %17 = sbr.rel (0) target = $region17
    $region16: #{tpu_custom_call.1} parent=1 // pred_region
      _
    $region17: #{tpu_custom_call.1} parent=1 // pred_fallthru
      _
    %v18 = vld [vmem:[%s0] sm:$0xff]
    %v19 = vld [vmem:[%s0 + $0x8] sm:$0xff]
    %v20 = vld [vmem:[%s1] sm:$0xff]
    %v21 = vld [vmem:[%s2] sm:$0xff]
    %v22 = vld [vmem:[%s3] sm:$0xff]
    %24 = vset.pattern.permute.xlu0 0
    %25 = vperm.xlu0 %24, %v21
    %v26 = vpop.permute.xlu0 %25
    %v28 = vmul.f32 %v18, %v26
    %v29 = vmul.f32 %v19, %v26
    %v30 = vround.ne.pseudo %v28
    %v31 = vround.ne.pseudo %v29
    %33 = vset.pattern.permute.xlu0 0
    %34 = vperm.xlu0 %33, %v22
    %v35 = vpop.permute.xlu0 %34
    %v37 = vadd.f32 %v30, %v35
    %v38 = vadd.f32 %v31, %v35
    %v39 = vmax.f32 %v37, -128.0
    %v40 = vmax.f32 %v38, -128.0
    %v41 = vmin.f32 %v39, 127.0
    %v42 = vmin.f32 %v40, 127.0
    %v43 = vsub.f32 %v41, %v35
    %v44 = vsub.f32 %v42, %v35
    %46 = vset.pattern.permute.xlu0 0
    %47 = vperm.xlu0 %46, %v20
    %v48 = vpop.permute.xlu0 %47
    %v50 = vmul.f32 %v43, %v48
    %v51 = vmul.f32 %v44, %v48
    %52 = vst [vmem:[#allocation2] sm:$0xff] %v50
    %53 = vst [vmem:[#allocation2 + $0x8] sm:$0xff] %v51
    // Predicated region
    $region18: #{tpu_custom_call.1} parent=1 // pred_check
      _
    $region19: #{tpu_custom_call.1} parent=1 // pred_check_branch
      %55 = sbr.rel (0) target = $region21
    $region20: #{tpu_custom_call.1} parent=1 // pred_region
      %57 = vsyncadd [#allocation3], 0
      %s59 = sshll.u32 [#allocation2], 4
      %s60 = int_to_ptr.vmem [resolvable:$true] %s59
      %s61 = sshll.u32 %s4, 4
      %s62 = int_to_ptr.hbm [resolvable:$true] %s61
      %64 = dma.vmem_to_hbm [thread:$0]  %s60, 256, %s62, [#allocation3]
    $region21: #{tpu_custom_call.1} parent=1 // pred_fallthru
      _
    // Predicated region
    $region22: #{tpu_custom_call.1} parent=1 // pred_check
      _
    $region23: #{tpu_custom_call.1} parent=1 // pred_check_branch
      %66 = sbr.rel (0) target = $region25
    $region24: #{tpu_custom_call.1} parent=1 // pred_region
      %68 = dma.done [#allocation3], 256
    $region25: #{tpu_custom_call.1} parent=1 // pred_fallthru
      _
    %69 = vsyncpa [#allocation3], 1

</llo_original>
